<compile_context>
chip_gen: v7x
topology: tpu7x:2x2x1
jax: 0.10.0
libtpu: 0.0.40
codegen_flags: <defaults>
</compile_context>

<pallas_src>
import jax
import jax.numpy as jnp
from jax.experimental import pallas as pl
from jax.experimental.pallas import tpu as pltpu


def _embed_onehot_kernel(ids_ref, wtab_ref, tok_ref):
    # ids_ref : (tm, 1)  int32 VMEM  -- token ids for this row tile
    # wtab_ref: (Vp, D)  f32  VMEM   -- zero-padded word table (VMEM-resident)
    # tok_ref : (tm, D)  f32  VMEM   -- gathered embedding rows (output tile)
    tm = tok_ref.shape[0]
    vp = wtab_ref.shape[0]
    vocab_iota = jax.lax.broadcasted_iota(jnp.int32, (tm, vp), 1)
    one_hot = (ids_ref[...] == vocab_iota).astype(wtab_ref.dtype)   # (tm, Vp)
    # One MXU matmul per tile; the 1.0 / 0.0 one-hot keeps the result exact to
    # within f32-matmul rounding (tolerance in the check below covers even a
    # worst-case bf16-demoted pass).
    tok_ref[...] = jnp.dot(
        one_hot, wtab_ref[...], preferred_element_type=jnp.float32
    ).astype(tok_ref.dtype)


def _choose_row_tile(n, row_tile):
    """Largest multiple-of-8 tile <= row_tile that divides n (no padding);
    falls back to a padded layout only if no such divisor exists."""
    cap = min(row_tile, n)
    cap -= cap % 8
    for cand in range(cap, 7, -8):
        if n % cand == 0:
            return cand, n                      # exact tiling, no padding
    tm = max(cap, 8)                            # rare fallback: pad rows
    return tm, pl.cdiv(n, tm) * tm


def embeddings_forward(input_ids, word_emb, pos_emb, *, row_tile=1024):
    """Returns (X_token, X_pos), each (B, S, D), matching Embeddings.forward."""
    B, S = input_ids.shape
    V, D = word_emb.shape
    L, Dp = pos_emb.shape
    assert D == Dp
    assert S <= L, "seq_len exceeds max_seq_len of the position table"

    N = B * S
    tm, n_pad = _choose_row_tile(N, row_tile)

    # Per-tile (tm, 1) VMEM input; clamp like jnp.take (nn.Embedding would
    # raise on out-of-range ids).
    ids = jnp.clip(input_ids.reshape(-1).astype(jnp.int32), 0, V - 1)
    if n_pad != N:
        ids = jnp.pad(ids, (0, n_pad - N))      # pad with id 0 (valid row)
    ids = ids.reshape(n_pad, 1)

    # Pad vocab rows to a lane multiple so the one-hot contraction is MXU-clean.
    Vp = pl.cdiv(V, 128) * 128
    wtab = word_emb if Vp == V else jnp.pad(word_emb, ((0, Vp - V), (0, 0)))

    grid_spec = pltpu.PrefetchScalarGridSpec(
        num_scalar_prefetch=0,
        grid=(n_pad // tm,),
        in_specs=[
            pl.BlockSpec((tm, 1), lambda t: (t, 0)),    # ids: per-tile, pipelined
            pl.BlockSpec((Vp, D), lambda t: (0, 0)),    # table: resident in VMEM
        ],
        out_specs=pl.BlockSpec((tm, D), lambda t: (t, 0)),
    )
    tok_flat = pl.pallas_call(
        _embed_onehot_kernel,
        out_shape=jax.ShapeDtypeStruct((n_pad, D), word_emb.dtype),
        grid_spec=grid_spec,
        compiler_params=pltpu.CompilerParams(
            dimension_semantics=("parallel",)),
    )(ids, wtab)

    x_token = (tok_flat if n_pad == N else tok_flat[:N]).reshape(B, S, D)
    # X_pos is the same (S, D) slab for every batch element: broadcast in the
    # wrapper instead of writing it B times from the kernel.
    x_pos = jnp.broadcast_to(pos_emb[:S][None, :, :], (B, S, D))
    # TODO(synk): self.dropout exists in the PyTorch module but is never
    # applied in forward(), so it is intentionally omitted here.
    return x_token, x_pos


if __name__ == "__main__":
    # Small shapes consistent with the module (embedding_dim=128, vocab_size=100).
    B, S = 2, 16            # batch, seq_len
    V, D = 100, 128         # vocab_size, embedding_dim
    L = 512                 # max_seq_len (only first S rows are used)

    key = jax.random.PRNGKey(0)
    k_ids, k_w, k_p = jax.random.split(key, 3)

    input_ids = jax.random.randint(k_ids, (B, S), 0, V, dtype=jnp.int32)
    # deterministic parameter init: normal(std=0.02), matching the torch init
    word_emb = 0.02 * jax.random.normal(k_w, (V, D), dtype=jnp.float32)
    pos_emb = 0.02 * jax.random.normal(k_p, (L, D), dtype=jnp.float32)

    x_token, x_pos = embeddings_forward(input_ids, word_emb, pos_emb)
    jax.block_until_ready((x_token, x_pos))

    # reference (plain JAX) check
    ref_tok = jnp.take(word_emb, input_ids, axis=0)
    ref_pos = jnp.broadcast_to(pos_emb[:S][None, :, :], (B, S, D))
    assert x_token.shape == (B, S, D) and x_pos.shape == (B, S, D)
    assert jnp.allclose(x_token, ref_tok, atol=3e-4, rtol=1e-3)
    assert jnp.array_equal(x_pos, ref_pos)

    print("KERNEL_OK")
</pallas_src>

<mosaic_0001>
module attributes {stable_mosaic.version = 11 : i64} {
  func.func @_embed_onehot_kernel(%arg0: i32, %arg1: memref<32x1xi32, #tpu.memory_space<vmem>>, %arg2: memref<128x128xf32, #tpu.memory_space<vmem>>, %arg3: memref<32x128xf32, #tpu.memory_space<vmem>>) attributes {dimension_semantics = [#tpu.dimension_semantics<parallel>], iteration_bounds = array<i64: 1>, scalar_prefetch = 0 : i64, scratch_operands = 0 : i64, tpu.core_type = #tpu.core_type<tc>, window_params = [{transform_indices = @transform_0, window_bounds = array<i64: 32, 1>}, {pipeline_mode = #tpu.pipeline_mode<synchronous>, transform_indices = @transform_1, window_bounds = array<i64: 128, 128>}, {transform_indices = @transform_2, window_bounds = array<i64: 32, 128>}]} {
    %0 = tpu.iota {dimensions = array<i32: 1>} : vector<32x128xi32>
    %c0 = arith.constant 0 : index
    %c0_0 = arith.constant 0 : index
    %1 = vector.load %arg1[%c0, %c0_0] : memref<32x1xi32, #tpu.memory_space<vmem>>, vector<32x1xi32>
    %2 = vector.broadcast %1 : vector<32x1xi32> to vector<32x128xi32>
    %3 = arith.cmpi eq, %2, %0 : vector<32x128xi32>
    %4 = arith.extui %3 : vector<32x128xi1> to vector<32x128xi32>
    %5 = arith.sitofp %4 : vector<32x128xi32> to vector<32x128xf32>
    %c0_1 = arith.constant 0 : index
    %c0_2 = arith.constant 0 : index
    %6 = vector.load %arg2[%c0_1, %c0_2] : memref<128x128xf32, #tpu.memory_space<vmem>>, vector<128x128xf32>
    %cst = arith.constant dense<0.000000e+00> : vector<32x128xf32>
    %7 = tpu.matmul %5, %6, %cst {dimension_numbers = #tpu.dot_dimension_numbers<[1], [0], [0], [1], [0, 0, 1, 1], [], []>} : vector<32x128xf32>, vector<128x128xf32>, vector<32x128xf32> -> vector<32x128xf32>
    %c0_3 = arith.constant 0 : index
    %c0_4 = arith.constant 0 : index
    %8 = vector.load %arg3[%c0_3, %c0_4] : memref<32x128xf32, #tpu.memory_space<vmem>>, vector<32x128xf32>
    tpu.vector_store %arg3[%c0_3, %c0_4], %7 {strides = array<i32>} : memref<32x128xf32, #tpu.memory_space<vmem>>, vector<32x128xf32>,
    return
  }
  func.func @transform_0(%arg0: i32) -> (i32, i32) {
    %c0_i32 = arith.constant 0 : i32
    %c0_i32_0 = arith.constant 0 : i32
    return %arg0, %c0_i32 : i32, i32
  }
  func.func @transform_1(%arg0: i32) -> (i32, i32) {
    %c0_i32 = arith.constant 0 : i32
    %c0_i32_0 = arith.constant 0 : i32
    %c0_i32_1 = arith.constant 0 : i32
    return %c0_i32, %c0_i32_0 : i32, i32
  }
  func.func @transform_2(%arg0: i32) -> (i32, i32) {
    %c0_i32 = arith.constant 0 : i32
    %c0_i32_0 = arith.constant 0 : i32
    return %arg0, %c0_i32 : i32, i32
  }
}

</mosaic_0001>

<llo_original>
// kernel: tpu_custom_call.1
$region0: #{tpu_custom_call.1}
  #allocation0 [shape = 'u32[]', space=smem, size = 0x4, offset = 0x4, fixed_abs, tag = 'smem constant byte address 0x4 - core index']
  #allocation1 [shape = 'u32[144,128]{1,0:T(1,128)}', space=vmem, size = 0x12000, scoped, tag = 'internal scratch']
  %s0 = inlined_call_operand.vmem [shape: s32[32,1], index: 0, kind: input, shape index: {}]
  %s1 = inlined_call_operand.hbm [shape: f32[128,128], index: 1, kind: input, shape index: {}]
  %s2 = inlined_call_operand.hbm [shape: f32[32,128], index: 2, kind: output, shape index: {}]
  %s3 = sld [smem:[#allocation0]]
  $region22: #{tpu_custom_call.1} parent=0
    _
  %s5 = ssub.s32 1, %s3
  %s6 = scalar_select 0, %s5, %s3
  $region1: #{tpu_custom_call.1} parent=0
    #allocation2 [shape = 'u8[65536]{0}', space=vmem, size = 0x10000, scoped, tag = 'input window, operand 1, single buffered']
    #allocation3 [shape = 's32[1]{0}', space=sflag, size = 0x4, scoped, tag = 'scoped memory for tpu_custom_call.1']
    #allocation4 [shape = 's32[1]{0}', space=sflag, size = 0x4, scoped, tag = 'scoped memory for tpu_custom_call.1']
    #allocation5 [shape = 'u8[16384]{0}', space=vmem, size = 0x4000, scoped, tag = 'output window, operand 0, single buffered']
    %7 = vsyncpa [#allocation3], 0
    %8 = vsyncpa [#allocation4], 0
    // Predicated region
    $region2: #{tpu_custom_call.1} parent=1 // pred_check
      _
    $region3: #{tpu_custom_call.1} parent=1 // pred_check_branch
      %10 = sbr.rel (0) target = $region5
    $region4: #{tpu_custom_call.1} parent=1 // pred_region
      _
    $region5: #{tpu_custom_call.1} parent=1 // pred_fallthru
      _
    // Predicated region
    $region6: #{tpu_custom_call.1} parent=1 // pred_check
      _
    $region7: #{tpu_custom_call.1} parent=1 // pred_check_branch
      %12 = sbr.rel (0) target = $region9
    $region8: #{tpu_custom_call.1} parent=1 // pred_region
      %s14 = ssub.s32 2048, 2048
      %15 = vsyncadd [#allocation3], %s14
      %s16 = sshll.u32 [#allocation2], 4
      %s17 = int_to_ptr.vmem [resolvable:$true] %s16
      %22 = dma.hbm_to_vmem [thread:$0]  %s1, 2048, %s17, [#allocation3], 128, 128, 8
    $region9: #{tpu_custom_call.1} parent=1 // pred_fallthru
      _
    // Predicated region
    $region10: #{tpu_custom_call.1} parent=1 // pred_check
      _
    $region11: #{tpu_custom_call.1} parent=1 // pred_check_branch
      %24 = sbr.rel (0) target = $region13
    $region12: #{tpu_custom_call.1} parent=1 // pred_region
      %25 = dma.done [#allocation3], 2048
    $region13: #{tpu_custom_call.1} parent=1 // pred_fallthru
      _
    %v26 = vlaneseq
    %v27 = vand.u32 %v26, 127
    %v28 = vld [vmem:[%s0] sm:$0xff]
    %v29 = vld [vmem:[%s0 + $0x8] sm:$0xff]
    %v30 = vld [vmem:[%s0 + $0x10] sm:$0xff]
    %v31 = vld [vmem:[%s0 + $0x18] sm:$0xff]
    %32 = vset.pattern.permute.xlu0 0
    %33 = vperm.xlu0 %32, %v28
    %v34 = vpop.permute.xlu0 %33
    %35 = vset.pattern.permute.xlu0 0
    %36 = vperm.xlu0 %35, %v29
    %v37 = vpop.permute.xlu0 %36
    %38 = vset.pattern.permute.xlu0 0
    %39 = vperm.xlu0 %38, %v30
    %v40 = vpop.permute.xlu0 %39
    %41 = vset.pattern.permute.xlu0 0
    %42 = vperm.xlu0 %41, %v31
    %v43 = vpop.permute.xlu0 %42
    %vm44 = vcmp.eq.s32.totalorder %v34, %v27
    %vm45 = vcmp.eq.s32.totalorder %v37, %v27
    %vm46 = vcmp.eq.s32.totalorder %v40, %v27
    %vm47 = vcmp.eq.s32.totalorder %v43, %v27
    %v48 = vsel %vm44, 1, 0
    %v49 = vsel %vm45, 1, 0
    %v50 = vsel %vm46, 1, 0
    %v51 = vsel %vm47, 1, 0
    %v52 = vcvt.s32.f32 %v48
    %v53 = vcvt.s32.f32 %v49
    %v54 = vcvt.s32.f32 %v50
    %v55 = vcvt.s32.f32 %v51
    %v56 = vld [vmem:[#allocation2] sm:$0xff]
    %v57 = vld [vmem:[#allocation2 + $0x8] sm:$0xff]
    %v58 = vld [vmem:[#allocation2 + $0x10] sm:$0xff]
    %v59 = vld [vmem:[#allocation2 + $0x18] sm:$0xff]
    %v60 = vld [vmem:[#allocation2 + $0x20] sm:$0xff]
    %v61 = vld [vmem:[#allocation2 + $0x28] sm:$0xff]
    %v62 = vld [vmem:[#allocation2 + $0x30] sm:$0xff]
    %v63 = vld [vmem:[#allocation2 + $0x38] sm:$0xff]
    %v64 = vld [vmem:[#allocation2 + $0x40] sm:$0xff]
    %v65 = vld [vmem:[#allocation2 + $0x48] sm:$0xff]
    %v66 = vld [vmem:[#allocation2 + $0x50] sm:$0xff]
    %v67 = vld [vmem:[#allocation2 + $0x58] sm:$0xff]
    %v68 = vld [vmem:[#allocation2 + $0x60] sm:$0xff]
    %v69 = vld [vmem:[#allocation2 + $0x68] sm:$0xff]
    %v70 = vld [vmem:[#allocation2 + $0x70] sm:$0xff]
    %v71 = vld [vmem:[#allocation2 + $0x78] sm:$0xff]
    %72 = vmatprep.subr.mxu0 0.0
    %73 = vmatpush1.msra.mxu0 %v56
    %74 = vmatprep.subr.mxu0 0.0
    %75 = vmatpush1.msra.mxu0 %v57
    %76 = vmatprep.subr.mxu0 0.0
    %77 = vmatpush1.msra.mxu0 %v58
    %78 = vmatprep.subr.mxu0 0.0
    %79 = vmatpush1.msra.mxu0 %v59
    %80 = vmatprep.subr.mxu0 0.0
    %81 = vmatpush1.msra.mxu0 %v60
    %82 = vmatprep.subr.mxu0 0.0
    %83 = vmatpush1.msra.mxu0 %v61
    %84 = vmatprep.subr.mxu0 0.0
    %85 = vmatpush1.msra.mxu0 %v62
    %86 = vmatprep.subr.mxu0 0.0
    %87 = vmatpush1.msra.mxu0 %v63
    %88 = vmatprep.subr.mxu0 0.0
    %89 = vmatpush1.msra.mxu0 %v64
    %90 = vmatprep.subr.mxu0 0.0
    %91 = vmatpush1.msra.mxu0 %v65
    %92 = vmatprep.subr.mxu0 0.0
    %93 = vmatpush1.msra.mxu0 %v66
    %94 = vmatprep.subr.mxu0 0.0
    %95 = vmatpush1.msra.mxu0 %v67
    %96 = vmatprep.subr.mxu0 0.0
    %97 = vmatpush1.msra.mxu0 %v68
    %98 = vmatprep.subr.mxu0 0.0
    %99 = vmatpush1.msra.mxu0 %v69
    %100 = vmatprep.subr.mxu0 0.0
    %101 = vmatpush1.msra.mxu0 %v70
    %102 = vmatprep.subr.mxu0 0.0
    %103 = vmatpush1.msra.mxu0 %v71
    %104 = vmatprep.subr.mxu0 0.0
    %105 = vmatpush1.msra.mxu0 0.0
    %106 = vmatprep.subr.mxu0 0.0
    %107 = vmatpush1.msra.mxu0 0.0
    %108 = vmatprep.subr.mxu0 0.0
    %109 = vmatpush1.msra.mxu0 0.0
    %110 = vmatprep.subr.mxu0 0.0
    %111 = vmatpush1.msra.mxu0 0.0
    %112 = vmatprep.subr.mxu0 0.0
    %113 = vmatpush1.msra.mxu0 0.0
    %114 = vmatprep.subr.mxu0 0.0
    %115 = vmatpush1.msra.mxu0 0.0
    %116 = vmatprep.subr.mxu0 0.0
    %117 = vmatpush1.msra.mxu0 0.0
    %118 = vmatprep.subr.mxu0 0.0
    %119 = vmatpush1.msra.mxu0 0.0
    %120 = vmatprep.subr.mxu0 0.0
    %121 = vmatpush1.msra.mxu0 0.0
    %122 = vmatprep.subr.mxu0 0.0
    %123 = vmatpush1.msra.mxu0 0.0
    %124 = vmatprep.subr.mxu0 0.0
    %125 = vmatpush1.msra.mxu0 0.0
    %126 = vmatprep.subr.mxu0 0.0
    %127 = vmatpush1.msra.mxu0 0.0
    %128 = vmatprep.subr.mxu0 0.0
    %129 = vmatpush1.msra.mxu0 0.0
    %130 = vmatprep.subr.mxu0 0.0
    %131 = vmatpush1.msra.mxu0 0.0
    %132 = vmatprep.subr.mxu0 0.0
    %133 = vmatpush1.msra.mxu0 0.0
    %134 = vmatprep.subr.mxu0 0.0
    %135 = vmatpush1.msra.mxu0 0.0
    %136 = vmatprep.mubr.f32.mxu0 0.0
    %137 = vmatmul.mubr.f32.gmra.mrb[0].mxu0 %v52
    %v138 = vpop.f32.mrb[0].mxu0
    %v139 = vadd.f32 0.0, %v138
    %v140 = vpop.f32.mrb[0].mxu0
    %141 = vmatprep.mubr.f32.mxu0 0.0
    %142 = vmatmul.mubr.f32.gmra.mrb[0].mxu0 %v53
    %v143 = vpop.f32.mrb[0].mxu0
    %v144 = vadd.f32 0.0, %v143
    %v145 = vpop.f32.mrb[0].mxu0
    %146 = vmatprep.mubr.f32.mxu0 0.0
    %147 = vmatmul.mubr.f32.gmra.mrb[0].mxu0 %v54
    %v148 = vpop.f32.mrb[0].mxu0
    %v149 = vadd.f32 0.0, %v148
    %v150 = vpop.f32.mrb[0].mxu0
    %151 = vmatprep.mubr.f32.mxu0 0.0
    %152 = vmatmul.mubr.f32.gmra.mrb[0].mxu0 %v55
    %v153 = vpop.f32.mrb[0].mxu0
    %v154 = vadd.f32 0.0, %v153
    %v155 = vpop.f32.mrb[0].mxu0
    %156 = vdwg.mxu0
    %157 = vst [vmem:[#allocation5] sm:$0xff] %v139
    %158 = vst [vmem:[#allocation5 + $0x8] sm:$0xff] %v144
    %159 = vst [vmem:[#allocation5 + $0x10] sm:$0xff] %v149
    %160 = vst [vmem:[#allocation5 + $0x18] sm:$0xff] %v154
    // Predicated region
    $region14: #{tpu_custom_call.1} parent=1 // pred_check
      _
    $region15: #{tpu_custom_call.1} parent=1 // pred_check_branch
      %162 = sbr.rel (0) target = $region17
    $region16: #{tpu_custom_call.1} parent=1 // pred_region
      %s164 = ssub.s32 512, 512
      %165 = vsyncadd [#allocation4], %s164
      %s166 = sshll.u32 [#allocation5], 4
      %s167 = int_to_ptr.vmem [resolvable:$true] %s166
      %172 = dma.vmem_to_hbm [thread:$0]  %s167, 512, %s2, [#allocation4], 128, 128, 8
    $region17: #{tpu_custom_call.1} parent=1 // pred_fallthru
      _
    // Predicated region
    $region18: #{tpu_custom_call.1} parent=1 // pred_check
      _
    $region19: #{tpu_custom_call.1} parent=1 // pred_check_branch
      %174 = sbr.rel (0) target = $region21
    $region20: #{tpu_custom_call.1} parent=1 // pred_region
      %175 = dma.done [#allocation4], 512
    $region21: #{tpu_custom_call.1} parent=1 // pred_fallthru
      _
    %176 = vsyncpa [#allocation3], 1
    %177 = vsyncpa [#allocation4], 1

</llo_original>
